<compile_context>
chip_gen: v6e
topology: v6e:2x2x1
jax: 0.10.0
libtpu: 0.0.40
codegen_flags: <defaults>
</compile_context>

<pallas_src>
import jax
import jax.numpy as jnp
from jax import lax
from jax.experimental import pallas as pl
from jax.experimental.pallas import tpu as pltpu


def _round_up(x, m):
    return ((x + m - 1) // m) * m


# ---------------------------------------------------------------------------
# Path 1: VMEM-resident (packed) table + one-hot MXU gather.
# ---------------------------------------------------------------------------

def _onehot_gather_kernel(idx_ref, table_ref, out_ref):
    """One grid step gathers tile_g*pack embeddings via a one-hot matmul.

    idx_ref   : (tile_g, pack) int32, already offset by k*in_dim per lane k.
    table_ref : (pack*in_dim, pack*emb_dim) block-diagonal packed table (VMEM).
    out_ref   : (tile_g, pack*emb_dim) — lane-dense when pack*emb_dim == 128.
    """
    tile_g, pack = idx_ref.shape
    pin = table_ref.shape[0]
    dtype = table_ref.dtype

    iota = jax.lax.broadcasted_iota(jnp.int32, (tile_g, pin), 1)
    # Each k's one-hot lives in a disjoint row band (indices were offset by
    # k*in_dim), so the float sum is still an exact 0/1 matrix.
    onehot = (idx_ref[:, 0:1] == iota).astype(dtype)
    for k in range(1, pack):
        onehot = onehot + (idx_ref[:, k:k + 1] == iota).astype(dtype)

    out_ref[...] = jnp.dot(
        onehot,
        table_ref[...],
        preferred_element_type=jnp.float32,
        precision=lax.Precision.HIGHEST,   # exact gather (f32 multi-pass)
    ).astype(out_ref.dtype)


def _onehot_gather(flat_idx, emb_table, pack, orig_shape):
    in_dim, emb_dim = emb_table.shape
    n = flat_idx.shape[0]
    pin, ped = pack * in_dim, pack * emb_dim
    itemsize = emb_table.dtype.itemsize

    # --- tile selection ------------------------------------------------------
    g = -(-n // pack)                                   # packed output rows
    tile_g = max(8, _round_up(1024 // pack, 8))         # ~1024 lookups / step
    onehot_cap = max(8, ((2 * 1024 * 1024) // (pin * 4)) // 8 * 8)
    tile_g = min(tile_g, onehot_cap)                    # keep one-hot <= ~2 MiB
    tile_g = min(tile_g, _round_up(g, 8))               # don't over-pad tiny N
    g_pad = _round_up(g, tile_g)
    n_pad = g_pad * pack

    # --- host-side packing (plain JAX) ----------------------------------------
    idx_pad = jnp.zeros((n_pad,), jnp.int32).at[:n].set(flat_idx)
    idx_off = idx_pad.reshape(g_pad, pack) + (
        jnp.arange(pack, dtype=jnp.int32) * in_dim)[None, :]

    if pack == 1:
        table_packed = emb_table
    else:
        # Block-diagonal replication: pack lookups land in disjoint lane bands.
        table_packed = jnp.kron(jnp.eye(pack, dtype=emb_table.dtype), emb_table)

    cost = pl.CostEstimate(
        flops=2 * g_pad * pin * ped,
        transcendentals=0,
        bytes_accessed=(idx_off.size * 4
                        + table_packed.size * itemsize
                        + g_pad * ped * itemsize),
    )

    out_packed = pl.pallas_call(
        _onehot_gather_kernel,
        grid_spec=pltpu.PrefetchScalarGridSpec(
            num_scalar_prefetch=0,
            grid=(g_pad // tile_g,),
            in_specs=[
                # Blocked index tile (VMEM), one tile per grid step.
                pl.BlockSpec((tile_g, pack), lambda i: (i, 0)),
                # VMEM-resident packed table: constant block index -> loaded once.
                pl.BlockSpec((pin, ped), lambda i: (0, 0)),
            ],
            out_specs=pl.BlockSpec((tile_g, ped), lambda i: (i, 0)),
        ),
        out_shape=jax.ShapeDtypeStruct((g_pad, ped), emb_table.dtype),
        compiler_params=pltpu.CompilerParams(
            dimension_semantics=("parallel",),      # independent tiles -> megacore
            vmem_limit_bytes=32 * 1024 * 1024,      # safe on v5e/v6e/v7x
        ),
        cost_estimate=cost,
    )(idx_off, table_packed)

    out_flat = out_packed.reshape(n_pad, emb_dim)[:n]
    return out_flat.reshape(*orig_shape, emb_dim)


# ---------------------------------------------------------------------------
# Path 2: large-vocab fallback — manual double-buffered DMA row gather.
# ---------------------------------------------------------------------------

_GATHER_TILE = 8   # lookups per grid step; also the number of in-flight row DMAs


def _dma_gather_kernel(idx_ref, table_ref, out_ref, buf_ref, sem_ref):
    """Gather tile_n rows per grid step with double-buffered row DMAs.

    idx_ref   : SMEM (n_pad,) int32 (scalar-prefetched indices).
    table_ref : HBM (in_dim, emb_dim) — memory_space=pl.ANY, DMA'd manually.
    out_ref   : VMEM (tile_n, emb_dim) output block.
    buf_ref   : VMEM (2, tile_n, emb_dim) scratch (double buffer).
    sem_ref   : DMA semaphores (2, tile_n).
    """
    tile_n = out_ref.shape[0]
    i = pl.program_id(0)
    nt = pl.num_programs(0)

    def start_tile(t, slot):
        for j in range(tile_n):
            row = idx_ref[t * tile_n + j]
            pltpu.make_async_copy(
                table_ref.at[pl.ds(row, 1), :],
                buf_ref.at[slot, pl.ds(j, 1), :],
                sem_ref.at[slot, j],
            ).start()

    # Prime the pipeline on the first step.
    @pl.when(i == 0)
    def _():
        start_tile(0, 0)

    # Issue next tile's row fetches before waiting on the current tile, so the
    # HBM latency overlaps this step's work (and the next step's prologue).
    @pl.when(i + 1 < nt)
    def _():
        start_tile(i + 1, (i + 1) % 2)

    slot = i % 2
    for j in range(tile_n):
        pltpu.make_async_copy(
            table_ref.at[pl.ds(0, 1), :],          # dummy src, shape only
            buf_ref.at[slot, pl.ds(j, 1), :],
            sem_ref.at[slot, j],
        ).wait()

    out_ref[...] = buf_ref[slot]


def _dma_gather_fallback(flat_idx, emb_table, orig_shape):
    in_dim, emb_dim = emb_table.shape
    n = flat_idx.shape[0]
    itemsize = emb_table.dtype.itemsize
    tile_n = _GATHER_TILE
    n_pad = _round_up(n, tile_n)
    idx_pad = jnp.zeros((n_pad,), jnp.int32).at[:n].set(flat_idx)

    cost = pl.CostEstimate(
        flops=0,
        transcendentals=0,
        bytes_accessed=n_pad * 4 + 2 * n_pad * emb_dim * itemsize,
    )

    out_flat = pl.pallas_call(
        _dma_gather_kernel,
        grid_spec=pltpu.PrefetchScalarGridSpec(
            num_scalar_prefetch=1,
            grid=(n_pad // tile_n,),
            in_specs=[pl.BlockSpec(memory_space=pl.ANY)],   # table stays in HBM
            out_specs=pl.BlockSpec((tile_n, emb_dim), lambda i, idx: (i, 0)),
            scratch_shapes=[
                pltpu.VMEM((2, tile_n, emb_dim), emb_table.dtype),
                pltpu.SemaphoreType.DMA((2, tile_n)),
            ],
        ),
        out_shape=jax.ShapeDtypeStruct((n_pad, emb_dim), emb_table.dtype),
        compiler_params=pltpu.CompilerParams(
            # Cross-step double buffering carries state in scratch -> sequential.
            dimension_semantics=("arbitrary",),
        ),
        cost_estimate=cost,
    )(idx_pad, emb_table)
    # TODO(synk): deepen the prefetch (Buffered(3)-style 2-ahead issue) if the
    #             fallback ever becomes latency-critical for huge vocabularies.
    return out_flat[:n].reshape(*orig_shape, emb_dim)


# ---------------------------------------------------------------------------
# Public wrapper: SkipGram.forward == nn.Embedding lookup.
# ---------------------------------------------------------------------------

_MAX_ONEHOT_TABLE_BYTES = 6 * 1024 * 1024   # keep resident table well inside VMEM
_MAX_ONEHOT_TABLE_ROWS = 4096               # keep one-hot matmul work reasonable


def skipgram_forward(indices, emb_table):
    """Embedding lookup: indices (any int shape) -> (*indices.shape, emb_dim)."""
    in_dim, emb_dim = emb_table.shape
    orig_shape = indices.shape
    flat_idx = indices.reshape(-1).astype(jnp.int32)
    n = flat_idx.shape[0]

    if n == 0:
        return jnp.zeros((*orig_shape, emb_dim), emb_table.dtype)

    # PyTorch raises on out-of-range indices; we clamp to stay in-bounds.
    flat_idx = jnp.clip(flat_idx, 0, in_dim - 1)

    itemsize = emb_table.dtype.itemsize
    pack = 128 // emb_dim if (emb_dim < 128 and 128 % emb_dim == 0) else 1

    def _fits(p):
        pin, ped = p * in_dim, p * emb_dim
        return (pin <= _MAX_ONEHOT_TABLE_ROWS
                and pin * ped * itemsize <= _MAX_ONEHOT_TABLE_BYTES)

    if _fits(pack):
        return _onehot_gather(flat_idx, emb_table, pack, orig_shape)
    if pack > 1 and _fits(1):
        return _onehot_gather(flat_idx, emb_table, 1, orig_shape)
    return _dma_gather_fallback(flat_idx, emb_table, orig_shape)


if __name__ == "__main__":
    key = jax.random.PRNGKey(0)
    k_emb, k_idx, k_emb2, k_idx2 = jax.random.split(key, 4)

    # --- Path 1: small vocab (VMEM-resident one-hot gather) -------------------
    in_dim, emb_dim = 64, 32          # SkipGram(in_dim=64, emb_dim=32)
    batch, seq = 2, 8
    emb_table = jax.random.normal(k_emb, (in_dim, emb_dim), dtype=jnp.float32)
    x = jax.random.randint(k_idx, (batch, seq), 0, in_dim, dtype=jnp.int32)

    out = jax.block_until_ready(skipgram_forward(x, emb_table))
    ref = jnp.take(emb_table, x, axis=0)
    assert out.shape == (batch, seq, emb_dim), out.shape
    # With Precision.HIGHEST the gather is effectively exact; the tolerance is
    # kept loose only so the assert can never fire spuriously — a wrong-row
    # gather would produce O(1) errors and still be caught.
    assert jnp.allclose(out, ref, rtol=1e-2, atol=1e-2), "small-path mismatch"

    # --- Path 2: large vocab (manual double-buffered DMA gather) --------------
    big_in_dim, big_emb_dim = 8192, 128
    big_table = jax.random.normal(k_emb2, (big_in_dim, big_emb_dim),
                                  dtype=jnp.float32)
    x_big = jax.random.randint(k_idx2, (4, 16), 0, big_in_dim, dtype=jnp.int32)

    out_big = jax.block_until_ready(skipgram_forward(x_big, big_table))
    ref_big = jnp.take(big_table, x_big, axis=0)
    assert out_big.shape == (4, 16, big_emb_dim), out_big.shape
    assert jnp.array_equal(out_big, ref_big), "large-path mismatch"

    print("KERNEL_OK")
</pallas_src>

<mosaic_0001>
module attributes {stable_mosaic.version = 11 : i64} {
  func.func @_onehot_gather_kernel(%arg0: i32, %arg1: memref<8x4xi32, #tpu.memory_space<vmem>>, %arg2: memref<256x128xf32, #tpu.memory_space<vmem>>, %arg3: memref<8x128xf32, #tpu.memory_space<vmem>>) attributes {dimension_semantics = [#tpu.dimension_semantics<parallel>], iteration_bounds = array<i64: 1>, scalar_prefetch = 0 : i64, scratch_operands = 0 : i64, tpu.core_type = #tpu.core_type<tc>, window_params = [{transform_indices = @transform_0, window_bounds = array<i64: 8, 4>}, {pipeline_mode = #tpu.pipeline_mode<synchronous>, transform_indices = @transform_1, window_bounds = array<i64: 256, 128>}, {transform_indices = @transform_2, window_bounds = array<i64: 8, 128>}]} {
    %0 = tpu.iota {dimensions = array<i32: 1>} : vector<8x256xi32>
    %c0 = arith.constant 0 : index
    %c0_0 = arith.constant 0 : index
    %1 = vector.load %arg1[%c0, %c0_0] : memref<8x4xi32, #tpu.memory_space<vmem>>, vector<8x1xi32>
    %2 = vector.broadcast %1 : vector<8x1xi32> to vector<8x256xi32>
    %3 = arith.cmpi eq, %2, %0 : vector<8x256xi32>
    %4 = arith.extui %3 : vector<8x256xi1> to vector<8x256xi32>
    %5 = arith.sitofp %4 : vector<8x256xi32> to vector<8x256xf32>
    %c0_1 = arith.constant 0 : index
    %c1 = arith.constant 1 : index
    %6 = vector.load %arg1[%c0_1, %c1] : memref<8x4xi32, #tpu.memory_space<vmem>>, vector<8x1xi32>
    %7 = vector.broadcast %6 : vector<8x1xi32> to vector<8x256xi32>
    %8 = arith.cmpi eq, %7, %0 : vector<8x256xi32>
    %9 = arith.extui %8 : vector<8x256xi1> to vector<8x256xi32>
    %10 = arith.sitofp %9 : vector<8x256xi32> to vector<8x256xf32>
    %11 = arith.addf %5, %10 : vector<8x256xf32>
    %c0_2 = arith.constant 0 : index
    %c2 = arith.constant 2 : index
    %12 = vector.load %arg1[%c0_2, %c2] : memref<8x4xi32, #tpu.memory_space<vmem>>, vector<8x1xi32>
    %13 = vector.broadcast %12 : vector<8x1xi32> to vector<8x256xi32>
    %14 = arith.cmpi eq, %13, %0 : vector<8x256xi32>
    %15 = arith.extui %14 : vector<8x256xi1> to vector<8x256xi32>
    %16 = arith.sitofp %15 : vector<8x256xi32> to vector<8x256xf32>
    %17 = arith.addf %11, %16 : vector<8x256xf32>
    %c0_3 = arith.constant 0 : index
    %c3 = arith.constant 3 : index
    %18 = vector.load %arg1[%c0_3, %c3] : memref<8x4xi32, #tpu.memory_space<vmem>>, vector<8x1xi32>
    %19 = vector.broadcast %18 : vector<8x1xi32> to vector<8x256xi32>
    %20 = arith.cmpi eq, %19, %0 : vector<8x256xi32>
    %21 = arith.extui %20 : vector<8x256xi1> to vector<8x256xi32>
    %22 = arith.sitofp %21 : vector<8x256xi32> to vector<8x256xf32>
    %23 = arith.addf %17, %22 : vector<8x256xf32>
    %c0_4 = arith.constant 0 : index
    %c0_5 = arith.constant 0 : index
    %24 = vector.load %arg2[%c0_4, %c0_5] : memref<256x128xf32, #tpu.memory_space<vmem>>, vector<256x128xf32>
    %cst = arith.constant dense<0.000000e+00> : vector<8x128xf32>
    %25 = tpu.matmul %23, %24, %cst {dimension_numbers = #tpu.dot_dimension_numbers<[1], [0], [0], [1], [0, 0, 1, 1], [], []>, precision = #tpu.contract_precision<fp32>} : vector<8x256xf32>, vector<256x128xf32>, vector<8x128xf32> -> vector<8x128xf32>
    %c0_6 = arith.constant 0 : index
    %c0_7 = arith.constant 0 : index
    %26 = vector.load %arg3[%c0_6, %c0_7] : memref<8x128xf32, #tpu.memory_space<vmem>>, vector<8x128xf32>
    tpu.vector_store %arg3[%c0_6, %c0_7], %25 {strides = array<i32>} : memref<8x128xf32, #tpu.memory_space<vmem>>, vector<8x128xf32>,
    return
  }
  func.func @transform_0(%arg0: i32) -> (i32, i32) {
    %c0_i32 = arith.constant 0 : i32
    %c0_i32_0 = arith.constant 0 : i32
    return %arg0, %c0_i32 : i32, i32
  }
  func.func @transform_1(%arg0: i32) -> (i32, i32) {
    %c0_i32 = arith.constant 0 : i32
    %c0_i32_0 = arith.constant 0 : i32
    %c0_i32_1 = arith.constant 0 : i32
    return %c0_i32, %c0_i32_0 : i32, i32
  }
  func.func @transform_2(%arg0: i32) -> (i32, i32) {
    %c0_i32 = arith.constant 0 : i32
    %c0_i32_0 = arith.constant 0 : i32
    return %arg0, %c0_i32 : i32, i32
  }
}

</mosaic_0001>

<llo_original>
// kernel: tpu_custom_call.1
$region0: #{tpu_custom_call.1}
  #allocation0 [shape = 'u32[]', space=smem, size = 0x4, offset = 0x4, fixed_abs, tag = 'smem constant byte address 0x4 - core index']
  #allocation1 [shape = 'u32[144,128]{1,0:T(1,128)}', space=vmem, size = 0x12000, scoped, tag = 'internal scratch']
  %s0 = inlined_call_operand.vmem [shape: s32[8,4], index: 0, kind: input, shape index: {}]
  %s1 = inlined_call_operand.hbm [shape: f32[256,128], index: 1, kind: input, shape index: {}]
  %s2 = inlined_call_operand.hbm [shape: f32[8,128], index: 2, kind: output, shape index: {}]
  %s3 = sld [smem:[#allocation0]]
  $region22: #{tpu_custom_call.1} parent=0
    _
  %s5 = ssub.s32 1, %s3
  %s6 = scalar_select 0, %s5, %s3
  $region1: #{tpu_custom_call.1} parent=0
    #allocation2 [shape = 'u8[131072]{0}', space=vmem, size = 0x20000, scoped, tag = 'input window, operand 1, single buffered']
    #allocation3 [shape = 's32[1]{0}', space=sflag, size = 0x4, scoped, tag = 'scoped memory for tpu_custom_call.1']
    #allocation4 [shape = 's32[1]{0}', space=sflag, size = 0x4, scoped, tag = 'scoped memory for tpu_custom_call.1']
    #allocation5 [shape = 'u8[4096]{0}', space=vmem, size = 0x1000, scoped, tag = 'output window, operand 0, single buffered']
    %7 = vsyncpa [#allocation3], 0
    %8 = vsyncpa [#allocation4], 0
    // Predicated region
    $region2: #{tpu_custom_call.1} parent=1 // pred_check
      _
    $region3: #{tpu_custom_call.1} parent=1 // pred_check_branch
      %10 = sbr.rel (0) target = $region5
    $region4: #{tpu_custom_call.1} parent=1 // pred_region
      _
    $region5: #{tpu_custom_call.1} parent=1 // pred_fallthru
      _
    // Predicated region
    $region6: #{tpu_custom_call.1} parent=1 // pred_check
      _
    $region7: #{tpu_custom_call.1} parent=1 // pred_check_branch
      %12 = sbr.rel (0) target = $region9
    $region8: #{tpu_custom_call.1} parent=1 // pred_region
      %s14 = ssub.s32 4096, 4096
      %15 = vsyncadd [#allocation3], %s14
      %s16 = sshll.u32 [#allocation2], 4
      %s17 = int_to_ptr.vmem [resolvable:$true] %s16
      %22 = dma.hbm_to_vmem [thread:$0]  %s1, 4096, %s17, [#allocation3], 128, 128, 8
    $region9: #{tpu_custom_call.1} parent=1 // pred_fallthru
      _
    // Predicated region
    $region10: #{tpu_custom_call.1} parent=1 // pred_check
      _
    $region11: #{tpu_custom_call.1} parent=1 // pred_check_branch
      %24 = sbr.rel (0) target = $region13
    $region12: #{tpu_custom_call.1} parent=1 // pred_region
      %25 = dma.done [#allocation3], 4096
    $region13: #{tpu_custom_call.1} parent=1 // pred_fallthru
      _
    %v26 = vlaneseq
    %v27 = vand.u32 %v26, 127
    %v28 = vadd.s32 %v27, 128
    %v29 = vld [vmem:[%s0] sm:$0xff]
    %30 = vset.pattern.permute.xlu0 0
    %31 = vperm.xlu0 %30, %v29
    %v32 = vpop.permute.xlu0 %31
    %vm33 = vcmp.eq.s32.totalorder %v32, %v27
    %vm34 = vcmp.eq.s32.totalorder %v32, %v28
    %v35 = vsel %vm33, 1, 0
    %v36 = vsel %vm34, 1, 0
    %v37 = vcvt.s32.f32 %v35
    %v38 = vcvt.s32.f32 %v36
    %39 = vset.pattern.permute.xlu0 1
    %40 = vperm.xlu0 %39, %v29
    %v41 = vpop.permute.xlu0 %40
    %vm42 = vcmp.eq.s32.totalorder %v41, %v27
    %vm43 = vcmp.eq.s32.totalorder %v41, %v28
    %v44 = vsel %vm42, 1, 0
    %v45 = vsel %vm43, 1, 0
    %v46 = vcvt.s32.f32 %v44
    %v47 = vcvt.s32.f32 %v45
    %v48 = vadd.f32 %v37, %v46
    %v49 = vadd.f32 %v38, %v47
    %50 = vset.pattern.permute.xlu0 2
    %51 = vperm.xlu0 %50, %v29
    %v52 = vpop.permute.xlu0 %51
    %vm53 = vcmp.eq.s32.totalorder %v52, %v27
    %vm54 = vcmp.eq.s32.totalorder %v52, %v28
    %v55 = vsel %vm53, 1, 0
    %v56 = vsel %vm54, 1, 0
    %v57 = vcvt.s32.f32 %v55
    %v58 = vcvt.s32.f32 %v56
    %v59 = vadd.f32 %v48, %v57
    %v60 = vadd.f32 %v49, %v58
    %61 = vset.pattern.permute.xlu0 3
    %62 = vperm.xlu0 %61, %v29
    %v63 = vpop.permute.xlu0 %62
    %vm64 = vcmp.eq.s32.totalorder %v63, %v27
    %vm65 = vcmp.eq.s32.totalorder %v63, %v28
    %v66 = vsel %vm64, 1, 0
    %v67 = vsel %vm65, 1, 0
    %v68 = vcvt.s32.f32 %v66
    %v69 = vcvt.s32.f32 %v67
    %v70 = vadd.f32 %v59, %v68
    %v71 = vadd.f32 %v60, %v69
    %v72 = vld [vmem:[#allocation2] sm:$0xff]
    %v73 = vld [vmem:[#allocation2 + $0x8] sm:$0xff]
    %v74 = vld [vmem:[#allocation2 + $0x10] sm:$0xff]
    %v75 = vld [vmem:[#allocation2 + $0x18] sm:$0xff]
    %v76 = vld [vmem:[#allocation2 + $0x20] sm:$0xff]
    %v77 = vld [vmem:[#allocation2 + $0x28] sm:$0xff]
    %v78 = vld [vmem:[#allocation2 + $0x30] sm:$0xff]
    %v79 = vld [vmem:[#allocation2 + $0x38] sm:$0xff]
    %v80 = vld [vmem:[#allocation2 + $0x40] sm:$0xff]
    %v81 = vld [vmem:[#allocation2 + $0x48] sm:$0xff]
    %v82 = vld [vmem:[#allocation2 + $0x50] sm:$0xff]
    %v83 = vld [vmem:[#allocation2 + $0x58] sm:$0xff]
    %v84 = vld [vmem:[#allocation2 + $0x60] sm:$0xff]
    %v85 = vld [vmem:[#allocation2 + $0x68] sm:$0xff]
    %v86 = vld [vmem:[#allocation2 + $0x70] sm:$0xff]
    %v87 = vld [vmem:[#allocation2 + $0x78] sm:$0xff]
    %v88 = vld [vmem:[#allocation2 + $0x80] sm:$0xff]
    %v89 = vld [vmem:[#allocation2 + $0x88] sm:$0xff]
    %v90 = vld [vmem:[#allocation2 + $0x90] sm:$0xff]
    %v91 = vld [vmem:[#allocation2 + $0x98] sm:$0xff]
    %v92 = vld [vmem:[#allocation2 + $0xa0] sm:$0xff]
    %v93 = vld [vmem:[#allocation2 + $0xa8] sm:$0xff]
    %v94 = vld [vmem:[#allocation2 + $0xb0] sm:$0xff]
    %v95 = vld [vmem:[#allocation2 + $0xb8] sm:$0xff]
    %v96 = vld [vmem:[#allocation2 + $0xc0] sm:$0xff]
    %v97 = vld [vmem:[#allocation2 + $0xc8] sm:$0xff]
    %v98 = vld [vmem:[#allocation2 + $0xd0] sm:$0xff]
    %v99 = vld [vmem:[#allocation2 + $0xd8] sm:$0xff]
    %v100 = vld [vmem:[#allocation2 + $0xe0] sm:$0xff]
    %v101 = vld [vmem:[#allocation2 + $0xe8] sm:$0xff]
    %v102 = vld [vmem:[#allocation2 + $0xf0] sm:$0xff]
    %v103 = vld [vmem:[#allocation2 + $0xf8] sm:$0xff]
    %104 = vmatprep.subr.mxu0 0.0
    %v105 = vand.u32 %v87, 4294901760
    %106 = vmatpush1.msra.mxu0 %v105
    %107 = vmatprep.subr.mxu0 0.0
    %v108 = vand.u32 %v86, 4294901760
    %109 = vmatpush1.msra.mxu0 %v108
    %110 = vmatprep.subr.mxu0 0.0
    %v111 = vand.u32 %v85, 4294901760
    %112 = vmatpush1.msra.mxu0 %v111
    %113 = vmatprep.subr.mxu0 0.0
    %v114 = vand.u32 %v84, 4294901760
    %115 = vmatpush1.msra.mxu0 %v114
    %116 = vmatprep.subr.mxu0 0.0
    %v117 = vand.u32 %v83, 4294901760
    %118 = vmatpush1.msra.mxu0 %v117
    %119 = vmatprep.subr.mxu0 0.0
    %v120 = vand.u32 %v82, 4294901760
    %121 = vmatpush1.msra.mxu0 %v120
    %122 = vmatprep.subr.mxu0 0.0
    %v123 = vand.u32 %v81, 4294901760
    %124 = vmatpush1.msra.mxu0 %v123
    %125 = vmatprep.subr.mxu0 0.0
    %v126 = vand.u32 %v80, 4294901760
    %127 = vmatpush1.msra.mxu0 %v126
    %128 = vmatprep.subr.mxu0 0.0
    %v129 = vand.u32 %v79, 4294901760
    %130 = vmatpush1.msra.mxu0 %v129
    %131 = vmatprep.subr.mxu0 0.0
    %v132 = vand.u32 %v78, 4294901760
    %133 = vmatpush1.msra.mxu0 %v132
    %134 = vmatprep.subr.mxu0 0.0
    %v135 = vand.u32 %v77, 4294901760
    %136 = vmatpush1.msra.mxu0 %v135
    %137 = vmatprep.subr.mxu0 0.0
    %v138 = vand.u32 %v76, 4294901760
    %139 = vmatpush1.msra.mxu0 %v138
    %140 = vmatprep.subr.mxu0 0.0
    %v141 = vand.u32 %v75, 4294901760
    %142 = vmatpush1.msra.mxu0 %v141
    %143 = vmatprep.subr.mxu0 0.0
    %v144 = vand.u32 %v74, 4294901760
    %145 = vmatpush1.msra.mxu0 %v144
    %146 = vmatprep.subr.mxu0 0.0
    %v147 = vand.u32 %v73, 4294901760
    %148 = vmatpush1.msra.mxu0 %v147
    %149 = vmatprep.subr.mxu0 0.0
    %v150 = vand.u32 %v72, 4294901760
    %151 = vmatpush1.msra.mxu0 %v150
    %152 = vmatprep.subr.mxu0 0.0
    %v153 = vand.u32 %v103, 4294901760
    %154 = vmatpush2.msra.mxu0 %v153
    %155 = vmatprep.subr.mxu0 0.0
    %v156 = vand.u32 %v102, 4294901760
    %157 = vmatpush2.msra.mxu0 %v156
    %158 = vmatprep.subr.mxu0 0.0
    %v159 = vand.u32 %v101, 4294901760
    %160 = vmatpush2.msra.mxu0 %v159
    %161 = vmatprep.subr.mxu0 0.0
    %v162 = vand.u32 %v100, 4294901760
    %163 = vmatpush2.msra.mxu0 %v162
    %164 = vmatprep.subr.mxu0 0.0
    %v165 = vand.u32 %v99, 4294901760
    %166 = vmatpush2.msra.mxu0 %v165
    %167 = vmatprep.subr.mxu0 0.0
    %v168 = vand.u32 %v98, 4294901760
    %169 = vmatpush2.msra.mxu0 %v168
    %170 = vmatprep.subr.mxu0 0.0
    %v171 = vand.u32 %v97, 4294901760
    %172 = vmatpush2.msra.mxu0 %v171
    %173 = vmatprep.subr.mxu0 0.0
    %v174 = vand.u32 %v96, 4294901760
    %175 = vmatpush2.msra.mxu0 %v174
    %176 = vmatprep.subr.mxu0 0.0
    %v177 = vand.u32 %v95, 4294901760
    %178 = vmatpush2.msra.mxu0 %v177
    %179 = vmatprep.subr.mxu0 0.0
    %v180 = vand.u32 %v94, 4294901760
    %181 = vmatpush2.msra.mxu0 %v180
    %182 = vmatprep.subr.mxu0 0.0
    %v183 = vand.u32 %v93, 4294901760
    %184 = vmatpush2.msra.mxu0 %v183
    %185 = vmatprep.subr.mxu0 0.0
    %v186 = vand.u32 %v92, 4294901760
    %187 = vmatpush2.msra.mxu0 %v186
    %188 = vmatprep.subr.mxu0 0.0
    %v189 = vand.u32 %v91, 4294901760
    %190 = vmatpush2.msra.mxu0 %v189
    %191 = vmatprep.subr.mxu0 0.0
    %v192 = vand.u32 %v90, 4294901760
    %193 = vmatpush2.msra.mxu0 %v192
    %194 = vmatprep.subr.mxu0 0.0
    %v195 = vand.u32 %v89, 4294901760
    %196 = vmatpush2.msra.mxu0 %v195
    %197 = vmatprep.subr.mxu0 0.0
    %v198 = vand.u32 %v88, 4294901760
    %199 = vmatpush2.msra.mxu0 %v198
    %v200 = vand.u32 %v71, 4294901760
    %v201 = vsub.f32 %v71, %v200
    %v202 = vand.u32 %v201, 4294901760
    %v203 = vsub.f32 %v201, %v202
    %v204 = vand.u32 %v203, 4294901760
    %205 = vmatprep.mubr.f32.mxu0 %v204
    %v206 = vand.u32 %v70, 4294901760
    %v207 = vsub.f32 %v70, %v206
    %v208 = vand.u32 %v207, 4294901760
    %v209 = vsub.f32 %v207, %v208
    %v210 = vand.u32 %v209, 4294901760
    %211 = vmatmul.mubr.f32.gmra.mxu0 %v210
    %v212 = vpop.f32.mrf.mxu0
    %v213 = vadd.f32 0.0, %v212
    %v214 = vpop.f32.mrf.mxu0
    %215 = vdwg.mxu0
    %216 = vmatprep.subr.mxu0 0.0
    %v217 = vand.u32 %v87, 4294901760
    %v218 = vsub.f32 %v87, %v217
    %v219 = vand.u32 %v218, 4294901760
    %v220 = vsub.f32 %v218, %v219
    %v221 = vand.u32 %v220, 4294901760
    %222 = vmatpush1.msra.mxu0 %v221
    %223 = vmatprep.subr.mxu0 0.0
    %v224 = vand.u32 %v86, 4294901760
    %v225 = vsub.f32 %v86, %v224
    %v226 = vand.u32 %v225, 4294901760
    %v227 = vsub.f32 %v225, %v226
    %v228 = vand.u32 %v227, 4294901760
    %229 = vmatpush1.msra.mxu0 %v228
    %230 = vmatprep.subr.mxu0 0.0
    %v231 = vand.u32 %v85, 4294901760
    %v232 = vsub.f32 %v85, %v231
    %v233 = vand.u32 %v232, 4294901760
    %v234 = vsub.f32 %v232, %v233
    %v235 = vand.u32 %v234, 4294901760
    %236 = vmatpush1.msra.mxu0 %v235
    %237 = vmatprep.subr.mxu0 0.0
    %v238 = vand.u32 %v84, 4294901760
    %v239 = vsub.f32 %v84, %v238
    %v240 = vand.u32 %v239, 4294901760
    %v241 = vsub.f32 %v239, %v240
    %v242 = vand.u32 %v241, 4294901760
    %243 = vmatpush1.msra.mxu0 %v242
    %244 = vmatprep.subr.mxu0 0.0
    %v245 = vand.u32 %v83, 4294901760
    %v246 = vsub.f32 %v83, %v245
    %v247 = vand.u32 %v246, 4294901760
    %v248 = vsub.f32 %v246, %v247
    %v249 = vand.u32 %v248, 4294901760
    %250 = vmatpush1.msra.mxu0 %v249
    %251 = vmatprep.subr.mxu0 0.0
    %v252 = vand.u32 %v82, 4294901760
    %v253 = vsub.f32 %v82, %v252
    %v254 = vand.u32 %v253, 4294901760
    %v255 = vsub.f32 %v253, %v254
    %v256 = vand.u32 %v255, 4294901760
    %257 = vmatpush1.msra.mxu0 %v256
    %258 = vmatprep.subr.mxu0 0.0
    %v259 = vand.u32 %v81, 4294901760
    %v260 = vsub.f32 %v81, %v259
    %v261 = vand.u32 %v260, 4294901760
    %v262 = vsub.f32 %v260, %v261
    %v263 = vand.u32 %v262, 4294901760
    %264 = vmatpush1.msra.mxu0 %v263
    %265 = vmatprep.subr.mxu0 0.0
    %v266 = vand.u32 %v80, 4294901760
    %v267 = vsub.f32 %v80, %v266
    %v268 = vand.u32 %v267, 4294901760
    %v269 = vsub.f32 %v267, %v268
    %v270 = vand.u32 %v269, 4294901760
    %271 = vmatpush1.msra.mxu0 %v270
    %272 = vmatprep.subr.mxu0 0.0
    %v273 = vand.u32 %v79, 4294901760
    %v274 = vsub.f32 %v79, %v273
    %v275 = vand.u32 %v274, 4294901760
    %v276 = vsub.f32 %v274, %v275
    %v277 = vand.u32 %v276, 4294901760
    %278 = vmatpush1.msra.mxu0 %v277
    %279 = vmatprep.subr.mxu0 0.0
    %v280 = vand.u32 %v78, 4294901760
    %v281 = vsub.f32 %v78, %v280
    %v282 = vand.u32 %v281, 4294901760
    %v283 = vsub.f32 %v281, %v282
    %v284 = vand.u32 %v283, 4294901760
    %285 = vmatpush1.msra.mxu0 %v284
    %286 = vmatprep.subr.mxu0 0.0
    %v287 = vand.u32 %v77, 4294901760
    %v288 = vsub.f32 %v77, %v287
    %v289 = vand.u32 %v288, 4294901760
    %v290 = vsub.f32 %v288, %v289
    %v291 = vand.u32 %v290, 4294901760
    %292 = vmatpush1.msra.mxu0 %v291
    %293 = vmatprep.subr.mxu0 0.0
    %v294 = vand.u32 %v76, 4294901760
    %v295 = vsub.f32 %v76, %v294
    %v296 = vand.u32 %v295, 4294901760
    %v297 = vsub.f32 %v295, %v296
    %v298 = vand.u32 %v297, 4294901760
    %299 = vmatpush1.msra.mxu0 %v298
    %300 = vmatprep.subr.mxu0 0.0
    %v301 = vand.u32 %v75, 4294901760
    %v302 = vsub.f32 %v75, %v301
    %v303 = vand.u32 %v302, 4294901760
    %v304 = vsub.f32 %v302, %v303
    %v305 = vand.u32 %v304, 4294901760
    %306 = vmatpush1.msra.mxu0 %v305
    %307 = vmatprep.subr.mxu0 0.0
    %v308 = vand.u32 %v74, 4294901760
    %v309 = vsub.f32 %v74, %v308
    %v310 = vand.u32 %v309, 4294901760
    %v311 = vsub.f32 %v309, %v310
    %v312 = vand.u32 %v311, 4294901760
    %313 = vmatpush1.msra.mxu0 %v312
    %314 = vmatprep.subr.mxu0 0.0
    %v315 = vand.u32 %v73, 4294901760
    %v316 = vsub.f32 %v73, %v315
    %v317 = vand.u32 %v316, 4294901760
    %v318 = vsub.f32 %v316, %v317
    %v319 = vand.u32 %v318, 4294901760
    %320 = vmatpush1.msra.mxu0 %v319
    %321 = vmatprep.subr.mxu0 0.0
    %v322 = vand.u32 %v72, 4294901760
    %v323 = vsub.f32 %v72, %v322
    %v324 = vand.u32 %v323, 4294901760
    %v325 = vsub.f32 %v323, %v324
    %v326 = vand.u32 %v325, 4294901760
    %327 = vmatpush1.msra.mxu0 %v326
    %328 = vmatprep.subr.mxu0 0.0
    %v329 = vand.u32 %v103, 4294901760
    %v330 = vsub.f32 %v103, %v329
    %v331 = vand.u32 %v330, 4294901760
    %v332 = vsub.f32 %v330, %v331
    %v333 = vand.u32 %v332, 4294901760
    %334 = vmatpush2.msra.mxu0 %v333
    %335 = vmatprep.subr.mxu0 0.0
    %v336 = vand.u32 %v102, 4294901760
    %v337 = vsub.f32 %v102, %v336
    %v338 = vand.u32 %v337, 4294901760
    %v339 = vsub.f32 %v337, %v338
    %v340 = vand.u32 %v339, 4294901760
    %341 = vmatpush2.msra.mxu0 %v340
    %342 = vmatprep.subr.mxu0 0.0
    %v343 = vand.u32 %v101, 4294901760
    %v344 = vsub.f32 %v101, %v343
    %v345 = vand.u32 %v344, 4294901760
    %v346 = vsub.f32 %v344, %v345
    %v347 = vand.u32 %v346, 4294901760
    %348 = vmatpush2.msra.mxu0 %v347
    %349 = vmatprep.subr.mxu0 0.0
    %v350 = vand.u32 %v100, 4294901760
    %v351 = vsub.f32 %v100, %v350
    %v352 = vand.u32 %v351, 4294901760
    %v353 = vsub.f32 %v351, %v352
    %v354 = vand.u32 %v353, 4294901760
    %355 = vmatpush2.msra.mxu0 %v354
    %356 = vmatprep.subr.mxu0 0.0
    %v357 = vand.u32 %v99, 4294901760
    %v358 = vsub.f32 %v99, %v357
    %v359 = vand.u32 %v358, 4294901760
    %v360 = vsub.f32 %v358, %v359
    %v361 = vand.u32 %v360, 4294901760
    %362 = vmatpush2.msra.mxu0 %v361
    %363 = vmatprep.subr.mxu0 0.0
    %v364 = vand.u32 %v98, 4294901760
    %v365 = vsub.f32 %v98, %v364
    %v366 = vand.u32 %v365, 4294901760
    %v367 = vsub.f32 %v365, %v366
    %v368 = vand.u32 %v367, 4294901760
    %369 = vmatpush2.msra.mxu0 %v368
    %370 = vmatprep.subr.mxu0 0.0
    %v371 = vand.u32 %v97, 4294901760
    %v372 = vsub.f32 %v97, %v371
    %v373 = vand.u32 %v372, 4294901760
    %v374 = vsub.f32 %v372, %v373
    %v375 = vand.u32 %v374, 4294901760
    %376 = vmatpush2.msra.mxu0 %v375
    %377 = vmatprep.subr.mxu0 0.0
    %v378 = vand.u32 %v96, 4294901760
    %v379 = vsub.f32 %v96, %v378
    %v380 = vand.u32 %v379, 4294901760
    %v381 = vsub.f32 %v379, %v380
    %v382 = vand.u32 %v381, 4294901760
    %383 = vmatpush2.msra.mxu0 %v382
    %384 = vmatprep.subr.mxu0 0.0
    %v385 = vand.u32 %v95, 4294901760
    %v386 = vsub.f32 %v95, %v385
    %v387 = vand.u32 %v386, 4294901760
    %v388 = vsub.f32 %v386, %v387
    %v389 = vand.u32 %v388, 4294901760
    %390 = vmatpush2.msra.mxu0 %v389
    %391 = vmatprep.subr.mxu0 0.0
    %v392 = vand.u32 %v94, 4294901760
    %v393 = vsub.f32 %v94, %v392
    %v394 = vand.u32 %v393, 4294901760
    %v395 = vsub.f32 %v393, %v394
    %v396 = vand.u32 %v395, 4294901760
    %397 = vmatpush2.msra.mxu0 %v396
    %398 = vmatprep.subr.mxu0 0.0
    %v399 = vand.u32 %v93, 4294901760
    %v400 = vsub.f32 %v93, %v399
    %v401 = vand.u32 %v400, 4294901760
    %v402 = vsub.f32 %v400, %v401
    %v403 = vand.u32 %v402, 4294901760
    %404 = vmatpush2.msra.mxu0 %v403
    %405 = vmatprep.subr.mxu0 0.0
    %v406 = vand.u32 %v92, 4294901760
    %v407 = vsub.f32 %v92, %v406
    %v408 = vand.u32 %v407, 4294901760
    %v409 = vsub.f32 %v407, %v408
    %v410 = vand.u32 %v409, 4294901760
    %411 = vmatpush2.msra.mxu0 %v410
    %412 = vmatprep.subr.mxu0 0.0
    %v413 = vand.u32 %v91, 4294901760
    %v414 = vsub.f32 %v91, %v413
    %v415 = vand.u32 %v414, 4294901760
    %v416 = vsub.f32 %v414, %v415
    %v417 = vand.u32 %v416, 4294901760
    %418 = vmatpush2.msra.mxu0 %v417
    %419 = vmatprep.subr.mxu0 0.0
    %v420 = vand.u32 %v90, 4294901760
    %v421 = vsub.f32 %v90, %v420
    %v422 = vand.u32 %v421, 4294901760
    %v423 = vsub.f32 %v421, %v422
    %v424 = vand.u32 %v423, 4294901760
    %425 = vmatpush2.msra.mxu0 %v424
    %426 = vmatprep.subr.mxu0 0.0
    %v427 = vand.u32 %v89, 4294901760
    %v428 = vsub.f32 %v89, %v427
    %v429 = vand.u32 %v428, 4294901760
    %v430 = vsub.f32 %v428, %v429
    %v431 = vand.u32 %v430, 4294901760
    %432 = vmatpush2.msra.mxu0 %v431
    %433 = vmatprep.subr.mxu0 0.0
    %v434 = vand.u32 %v88, 4294901760
    %v435 = vsub.f32 %v88, %v434
    %v436 = vand.u32 %v435, 4294901760
    %v437 = vsub.f32 %v435, %v436
    %v438 = vand.u32 %v437, 4294901760
    %439 = vmatpush2.msra.mxu0 %v438
    %v440 = vand.u32 %v71, 4294901760
    %441 = vmatprep.mubr.f32.mxu0 %v440
    %v442 = vand.u32 %v70, 4294901760
    %443 = vmatmul.mubr.f32.gmra.mxu0 %v442
    %v444 = vpop.f32.mrf.mxu0
    %v445 = vadd.f32 %v213, %v444
    %v446 = vpop.f32.mrf.mxu0
    %447 = vdwg.mxu0
    %448 = vmatprep.subr.mxu0 0.0
    %v449 = vand.u32 %v87, 4294901760
    %v450 = vsub.f32 %v87, %v449
    %451 = vmatpush1.msra.mxu0 %v450
    %452 = vmatprep.subr.mxu0 0.0
    %v453 = vand.u32 %v86, 4294901760
    %v454 = vsub.f32 %v86, %v453
    %455 = vmatpush1.msra.mxu0 %v454
    %456 = vmatprep.subr.mxu0 0.0
    %v457 = vand.u32 %v85, 4294901760
    %v458 = vsub.f32 %v85, %v457
    %459 = vmatpush1.msra.mxu0 %v458
    %460 = vmatprep.subr.mxu0 0.0
    %v461 = vand.u32 %v84, 4294901760
    %v462 = vsub.f32 %v84, %v461
    %463 = vmatpush1.msra.mxu0 %v462
    %464 = vmatprep.subr.mxu0 0.0
    %v465 = vand.u32 %v83, 4294901760
    %v466 = vsub.f32 %v83, %v465
    %467 = vmatpush1.msra.mxu0 %v466
    %468 = vmatprep.subr.mxu0 0.0
    %v469 = vand.u32 %v82, 4294901760
    %v470 = vsub.f32 %v82, %v469
    %471 = vmatpush1.msra.mxu0 %v470
    %472 = vmatprep.subr.mxu0 0.0
    %v473 = vand.u32 %v81, 4294901760
    %v474 = vsub.f32 %v81, %v473
    %475 = vmatpush1.msra.mxu0 %v474
    %476 = vmatprep.subr.mxu0 0.0
    %v477 = vand.u32 %v80, 4294901760
    %v478 = vsub.f32 %v80, %v477
    %479 = vmatpush1.msra.mxu0 %v478
    %480 = vmatprep.subr.mxu0 0.0
    %v481 = vand.u32 %v79, 4294901760
    %v482 = vsub.f32 %v79, %v481
    %483 = vmatpush1.msra.mxu0 %v482
    %484 = vmatprep.subr.mxu0 0.0
    %v485 = vand.u32 %v78, 4294901760
    %v486 = vsub.f32 %v78, %v485
    %487 = vmatpush1.msra.mxu0 %v486
    %488 = vmatprep.subr.mxu0 0.0
    %v489 = vand.u32 %v77, 4294901760
    %v490 = vsub.f32 %v77, %v489
    %491 = vmatpush1.msra.mxu0 %v490
    %492 = vmatprep.subr.mxu0 0.0
    %v493 = vand.u32 %v76, 4294901760
    %v494 = vsub.f32 %v76, %v493
    %495 = vmatpush1.msra.mxu0 %v494
    %496 = vmatprep.subr.mxu0 0.0
    %v497 = vand.u32 %v75, 4294901760
    %v498 = vsub.f32 %v75, %v497
    %499 = vmatpush1.msra.mxu0 %v498
    %500 = vmatprep.subr.mxu0 0.0
    %v501 = vand.u32 %v74, 4294901760
    %v502 = vsub.f32 %v74, %v501
    %503 = vmatpush1.msra.mxu0 %v502
    %504 = vmatprep.subr.mxu0 0.0
    %v505 = vand.u32 %v73, 4294901760
    %v506 = vsub.f32 %v73, %v505
    %507 = vmatpush1.msra.mxu0 %v506
    %508 = vmatprep.subr.mxu0 0.0
    %v509 = vand.u32 %v72, 4294901760
    %v510 = vsub.f32 %v72, %v509
    %511 = vmatpush1.msra.mxu0 %v510
    %512 = vmatprep.subr.mxu0 0.0
    %v513 = vand.u32 %v103, 4294901760
    %v514 = vsub.f32 %v103, %v513
    %515 = vmatpush2.msra.mxu0 %v514
    %516 = vmatprep.subr.mxu0 0.0
    %v517 = vand.u32 %v102, 4294901760
    %v518 = vsub.f32 %v102, %v517
    %519 = vmatpush2.msra.mxu0 %v518
    %520 = vmatprep.subr.mxu0 0.0
    %v521 = vand.u32 %v101, 4294901760
    %v522 = vsub.f32 %v101, %v521
    %523 = vmatpush2.msra.mxu0 %v522
    %524 = vmatprep.subr.mxu0 0.0
    %v525 = vand.u32 %v100, 4294901760
    %v526 = vsub.f32 %v100, %v525
    %527 = vmatpush2.msra.mxu0 %v526
    %528 = vmatprep.subr.mxu0 0.0
    %v529 = vand.u32 %v99, 4294901760
    %v530 = vsub.f32 %v99, %v529
    %531 = vmatpush2.msra.mxu0 %v530
    %532 = vmatprep.subr.mxu0 0.0
    %v533 = vand.u32 %v98, 4294901760
    %v534 = vsub.f32 %v98, %v533
    %535 = vmatpush2.msra.mxu0 %v534
    %536 = vmatprep.subr.mxu0 0.0
    %v537 = vand.u32 %v97, 4294901760
    %v538 = vsub.f32 %v97, %v537
    %539 = vmatpush2.msra.mxu0 %v538
    %540 = vmatprep.subr.mxu0 0.0
    %v541 = vand.u32 %v96, 4294901760
    %v542 = vsub.f32 %v96, %v541
    %543 = vmatpush2.msra.mxu0 %v542
    %544 = vmatprep.subr.mxu0 0.0
    %v545 = vand.u32 %v95, 4294901760
    %v546 = vsub.f32 %v95, %v545
    %547 = vmatpush2.msra.mxu0 %v546
    %548 = vmatprep.subr.mxu0 0.0
    %v549 = vand.u32 %v94, 4294901760
    %v550 = vsub.f32 %v94, %v549
    %551 = vmatpush2.msra.mxu0 %v550
    %552 = vmatprep.subr.mxu0 0.0
    %v553 = vand.u32 %v93, 4294901760
    %v554 = vsub.f32 %v93, %v553
    %555 = vmatpush2.msra.mxu0 %v554
    %556 = vmatprep.subr.mxu0 0.0
    %v557 = vand.u32 %v92, 4294901760
    %v558 = vsub.f32 %v92, %v557
    %559 = vmatpush2.msra.mxu0 %v558
    %560 = vmatprep.subr.mxu0 0.0
    %v561 = vand.u32 %v91, 4294901760
    %v562 = vsub.f32 %v91, %v561
    %563 = vmatpush2.msra.mxu0 %v562
    %564 = vmatprep.subr.mxu0 0.0
    %v565 = vand.u32 %v90, 4294901760
    %v566 = vsub.f32 %v90, %v565
    %567 = vmatpush2.msra.mxu0 %v566
    %568 = vmatprep.subr.mxu0 0.0
    %v569 = vand.u32 %v89, 4294901760
    %v570 = vsub.f32 %v89, %v569
    %571 = vmatpush2.msra.mxu0 %v570
    %572 = vmatprep.subr.mxu0 0.0
    %v573 = vand.u32 %v88, 4294901760
    %v574 = vsub.f32 %v88, %v573
    %575 = vmatpush2.msra.mxu0 %v574
    %v576 = vand.u32 %v71, 4294901760
    %v577 = vsub.f32 %v71, %v576
    %578 = vmatprep.mubr.f32.mxu0 %v577
    %v579 = vand.u32 %v70, 4294901760
    %v580 = vsub.f32 %v70, %v579
    %581 = vmatmul.mubr.f32.gmra.mxu0 %v580
    %v582 = vpop.f32.mrf.mxu0
    %v583 = vadd.f32 %v445, %v582
    %v584 = vpop.f32.mrf.mxu0
    %585 = vdwg.mxu0
    %586 = vmatprep.subr.mxu0 0.0
    %v587 = vand.u32 %v87, 4294901760
    %588 = vmatpush1.msra.mxu0 %v587
    %589 = vmatprep.subr.mxu0 0.0
    %v590 = vand.u32 %v86, 4294901760
    %591 = vmatpush1.msra.mxu0 %v590
    %592 = vmatprep.subr.mxu0 0.0
    %v593 = vand.u32 %v85, 4294901760
    %594 = vmatpush1.msra.mxu0 %v593
    %595 = vmatprep.subr.mxu0 0.0
    %v596 = vand.u32 %v84, 4294901760
    %597 = vmatpush1.msra.mxu0 %v596
    %598 = vmatprep.subr.mxu0 0.0
    %v599 = vand.u32 %v83, 4294901760
    %600 = vmatpush1.msra.mxu0 %v599
    %601 = vmatprep.subr.mxu0 0.0
    %v602 = vand.u32 %v82, 4294901760
    %603 = vmatpush1.msra.mxu0 %v602
    %604 = vmatprep.subr.mxu0 0.0
    %v605 = vand.u32 %v81, 4294901760
    %606 = vmatpush1.msra.mxu0 %v605
    %607 = vmatprep.subr.mxu0 0.0
    %v608 = vand.u32 %v80, 4294901760
    %609 = vmatpush1.msra.mxu0 %v608
    %610 = vmatprep.subr.mxu0 0.0
    %v611 = vand.u32 %v79, 4294901760
    %612 = vmatpush1.msra.mxu0 %v611
    %613 = vmatprep.subr.mxu0 0.0
    %v614 = vand.u32 %v78, 4294901760
    %615 = vmatpush1.msra.mxu0 %v614
    %616 = vmatprep.subr.mxu0 0.0
    %v617 = vand.u32 %v77, 4294901760
    %618 = vmatpush1.msra.mxu0 %v617
    %619 = vmatprep.subr.mxu0 0.0
    %v620 = vand.u32 %v76, 4294901760
    %621 = vmatpush1.msra.mxu0 %v620
    %622 = vmatprep.subr.mxu0 0.0
    %v623 = vand.u32 %v75, 4294901760
    %624 = vmatpush1.msra.mxu0 %v623
    %625 = vmatprep.subr.mxu0 0.0
    %v626 = vand.u32 %v74, 4294901760
    %627 = vmatpush1.msra.mxu0 %v626
    %628 = vmatprep.subr.mxu0 0.0
    %v629 = vand.u32 %v73, 4294901760
    %630 = vmatpush1.msra.mxu0 %v629
    %631 = vmatprep.subr.mxu0 0.0
    %v632 = vand.u32 %v72, 4294901760
    %633 = vmatpush1.msra.mxu0 %v632
    %634 = vmatprep.subr.mxu0 0.0
    %v635 = vand.u32 %v103, 4294901760
    %636 = vmatpush2.msra.mxu0 %v635
    %637 = vmatprep.subr.mxu0 0.0
    %v638 = vand.u32 %v102, 4294901760
    %639 = vmatpush2.msra.mxu0 %v638
    %640 = vmatprep.subr.mxu0 0.0
    %v641 = vand.u32 %v101, 4294901760
    %642 = vmatpush2.msra.mxu0 %v641
    %643 = vmatprep.subr.mxu0 0.0
    %v644 = vand.u32 %v100, 4294901760
    %645 = vmatpush2.msra.mxu0 %v644
    %646 = vmatprep.subr.mxu0 0.0
    %v647 = vand.u32 %v99, 4294901760
    %648 = vmatpush2.msra.mxu0 %v647
    %649 = vmatprep.subr.mxu0 0.0
    %v650 = vand.u32 %v98, 4294901760
    %651 = vmatpush2.msra.mxu0 %v650
    %652 = vmatprep.subr.mxu0 0.0
    %v653 = vand.u32 %v97, 4294901760
    %654 = vmatpush2.msra.mxu0 %v653
    %655 = vmatprep.subr.mxu0 0.0
    %v656 = vand.u32 %v96, 4294901760
    %657 = vmatpush2.msra.mxu0 %v656
    %658 = vmatprep.subr.mxu0 0.0
    %v659 = vand.u32 %v95, 4294901760
    %660 = vmatpush2.msra.mxu0 %v659
    %661 = vmatprep.subr.mxu0 0.0
    %v662 = vand.u32 %v94, 4294901760
    %663 = vmatpush2.msra.mxu0 %v662
    %664 = vmatprep.subr.mxu0 0.0
    %v665 = vand.u32 %v93, 4294901760
    %666 = vmatpush2.msra.mxu0 %v665
    %667 = vmatprep.subr.mxu0 0.0
    %v668 = vand.u32 %v92, 4294901760
    %669 = vmatpush2.msra.mxu0 %v668
    %670 = vmatprep.subr.mxu0 0.0
    %v671 = vand.u32 %v91, 4294901760
    %672 = vmatpush2.msra.mxu0 %v671
    %673 = vmatprep.subr.mxu0 0.0
    %v674 = vand.u32 %v90, 4294901760
    %675 = vmatpush2.msra.mxu0 %v674
    %676 = vmatprep.subr.mxu0 0.0
    %v677 = vand.u32 %v89, 4294901760
    %678 = vmatpush2.msra.mxu0 %v677
    %679 = vmatprep.subr.mxu0 0.0
    %v680 = vand.u32 %v88, 4294901760
    %681 = vmatpush2.msra.mxu0 %v680
    %v682 = vand.u32 %v71, 4294901760
    %v683 = vsub.f32 %v71, %v682
    %v684 = vand.u32 %v683, 4294901760
    %685 = vmatprep.mubr.f32.mxu0 %v684
    %v686 = vand.u32 %v70, 4294901760
    %v687 = vsub.f32 %v70, %v686
    %v688 = vand.u32 %v687, 4294901760
    %689 = vmatmul.mubr.f32.gmra.mxu0 %v688
    %v690 = vpop.f32.mrf.mxu0
    %v691 = vadd.f32 %v583, %v690
    %v692 = vpop.f32.mrf.mxu0
    %693 = vdwg.mxu0
    %694 = vmatprep.subr.mxu0 0.0
    %v695 = vand.u32 %v87, 4294901760
    %v696 = vsub.f32 %v87, %v695
    %v697 = vand.u32 %v696, 4294901760
    %698 = vmatpush1.msra.mxu0 %v697
    %699 = vmatprep.subr.mxu0 0.0
    %v700 = vand.u32 %v86, 4294901760
    %v701 = vsub.f32 %v86, %v700
    %v702 = vand.u32 %v701, 4294901760
    %703 = vmatpush1.msra.mxu0 %v702
    %704 = vmatprep.subr.mxu0 0.0
    %v705 = vand.u32 %v85, 4294901760
    %v706 = vsub.f32 %v85, %v705
    %v707 = vand.u32 %v706, 4294901760
    %708 = vmatpush1.msra.mxu0 %v707
    %709 = vmatprep.subr.mxu0 0.0
    %v710 = vand.u32 %v84, 4294901760
    %v711 = vsub.f32 %v84, %v710
    %v712 = vand.u32 %v711, 4294901760
    %713 = vmatpush1.msra.mxu0 %v712
    %714 = vmatprep.subr.mxu0 0.0
    %v715 = vand.u32 %v83, 4294901760
    %v716 = vsub.f32 %v83, %v715
    %v717 = vand.u32 %v716, 4294901760
    %718 = vmatpush1.msra.mxu0 %v717
    %719 = vmatprep.subr.mxu0 0.0
    %v720 = vand.u32 %v82, 4294901760
    %v721 = vsub.f32 %v82, %v720
    %v722 = vand.u32 %v721, 4294901760
    %723 = vmatpush1.msra.mxu0 %v722
    %724 = vmatprep.subr.mxu0 0.0
    %v725 = vand.u32 %v81, 4294901760
    %v726 = vsub.f32 %v81, %v725
    %v727 = vand.u32 %v726, 4294901760
    %728 = vmatpush1.msra.mxu0 %v727
    %729 = vmatprep.subr.mxu0 0.0
    %v730 = vand.u32 %v80, 4294901760
    %v731 = vsub.f32 %v80, %v730
    %v732 = vand.u32 %v731, 4294901760
    %733 = vmatpush1.msra.mxu0 %v732
    %734 = vmatprep.subr.mxu0 0.0
    %v735 = vand.u32 %v79, 4294901760
    %v736 = vsub.f32 %v79, %v735
    %v737 = vand.u32 %v736, 4294901760
    %738 = vmatpush1.msra.mxu0 %v737
    %739 = vmatprep.subr.mxu0 0.0
    %v740 = vand.u32 %v78, 4294901760
    %v741 = vsub.f32 %v78, %v740
    %v742 = vand.u32 %v741, 4294901760
    %743 = vmatpush1.msra.mxu0 %v742
    %744 = vmatprep.subr.mxu0 0.0
    %v745 = vand.u32 %v77, 4294901760
    %v746 = vsub.f32 %v77, %v745
    %v747 = vand.u32 %v746, 4294901760
    %748 = vmatpush1.msra.mxu0 %v747
    %749 = vmatprep.subr.mxu0 0.0
    %v750 = vand.u32 %v76, 4294901760
    %v751 = vsub.f32 %v76, %v750
    %v752 = vand.u32 %v751, 4294901760
    %753 = vmatpush1.msra.mxu0 %v752
    %754 = vmatprep.subr.mxu0 0.0
    %v755 = vand.u32 %v75, 4294901760
    %v756 = vsub.f32 %v75, %v755
    %v757 = vand.u32 %v756, 4294901760
    %758 = vmatpush1.msra.mxu0 %v757
    %759 = vmatprep.subr.mxu0 0.0
    %v760 = vand.u32 %v74, 4294901760
    %v761 = vsub.f32 %v74, %v760
    %v762 = vand.u32 %v761, 4294901760
    %763 = vmatpush1.msra.mxu0 %v762
    %764 = vmatprep.subr.mxu0 0.0
    %v765 = vand.u32 %v73, 4294901760
    %v766 = vsub.f32 %v73, %v765
    %v767 = vand.u32 %v766, 4294901760
    %768 = vmatpush1.msra.mxu0 %v767
    %769 = vmatprep.subr.mxu0 0.0
    %v770 = vand.u32 %v72, 4294901760
    %v771 = vsub.f32 %v72, %v770
    %v772 = vand.u32 %v771, 4294901760
    %773 = vmatpush1.msra.mxu0 %v772
    %774 = vmatprep.subr.mxu0 0.0
    %v775 = vand.u32 %v103, 4294901760
    %v776 = vsub.f32 %v103, %v775
    %v777 = vand.u32 %v776, 4294901760
    %778 = vmatpush2.msra.mxu0 %v777
    %779 = vmatprep.subr.mxu0 0.0
    %v780 = vand.u32 %v102, 4294901760
    %v781 = vsub.f32 %v102, %v780
    %v782 = vand.u32 %v781, 4294901760
    %783 = vmatpush2.msra.mxu0 %v782
    %784 = vmatprep.subr.mxu0 0.0
    %v785 = vand.u32 %v101, 4294901760
    %v786 = vsub.f32 %v101, %v785
    %v787 = vand.u32 %v786, 4294901760
    %788 = vmatpush2.msra.mxu0 %v787
    %789 = vmatprep.subr.mxu0 0.0
    %v790 = vand.u32 %v100, 4294901760
    %v791 = vsub.f32 %v100, %v790
    %v792 = vand.u32 %v791, 4294901760
    %793 = vmatpush2.msra.mxu0 %v792
    %794 = vmatprep.subr.mxu0 0.0
    %v795 = vand.u32 %v99, 4294901760
    %v796 = vsub.f32 %v99, %v795
    %v797 = vand.u32 %v796, 4294901760
    %798 = vmatpush2.msra.mxu0 %v797
    %799 = vmatprep.subr.mxu0 0.0
    %v800 = vand.u32 %v98, 4294901760
    %v801 = vsub.f32 %v98, %v800
    %v802 = vand.u32 %v801, 4294901760
    %803 = vmatpush2.msra.mxu0 %v802
    %804 = vmatprep.subr.mxu0 0.0
    %v805 = vand.u32 %v97, 4294901760
    %v806 = vsub.f32 %v97, %v805
    %v807 = vand.u32 %v806, 4294901760
    %808 = vmatpush2.msra.mxu0 %v807
    %809 = vmatprep.subr.mxu0 0.0
    %v810 = vand.u32 %v96, 4294901760
    %v811 = vsub.f32 %v96, %v810
    %v812 = vand.u32 %v811, 4294901760
    %813 = vmatpush2.msra.mxu0 %v812
    %814 = vmatprep.subr.mxu0 0.0
    %v815 = vand.u32 %v95, 4294901760
    %v816 = vsub.f32 %v95, %v815
    %v817 = vand.u32 %v816, 4294901760
    %818 = vmatpush2.msra.mxu0 %v817
    %819 = vmatprep.subr.mxu0 0.0
    %v820 = vand.u32 %v94, 4294901760
    %v821 = vsub.f32 %v94, %v820
    %v822 = vand.u32 %v821, 4294901760
    %823 = vmatpush2.msra.mxu0 %v822
    %824 = vmatprep.subr.mxu0 0.0
    %v825 = vand.u32 %v93, 4294901760
    %v826 = vsub.f32 %v93, %v825
    %v827 = vand.u32 %v826, 4294901760
    %828 = vmatpush2.msra.mxu0 %v827
    %829 = vmatprep.subr.mxu0 0.0
    %v830 = vand.u32 %v92, 4294901760
    %v831 = vsub.f32 %v92, %v830
    %v832 = vand.u32 %v831, 4294901760
    %833 = vmatpush2.msra.mxu0 %v832
    %834 = vmatprep.subr.mxu0 0.0
    %v835 = vand.u32 %v91, 4294901760
    %v836 = vsub.f32 %v91, %v835
    %v837 = vand.u32 %v836, 4294901760
    %838 = vmatpush2.msra.mxu0 %v837
    %839 = vmatprep.subr.mxu0 0.0
    %v840 = vand.u32 %v90, 4294901760
    %v841 = vsub.f32 %v90, %v840
    %v842 = vand.u32 %v841, 4294901760
    %843 = vmatpush2.msra.mxu0 %v842
    %844 = vmatprep.subr.mxu0 0.0
    %v845 = vand.u32 %v89, 4294901760
    %v846 = vsub.f32 %v89, %v845
    %v847 = vand.u32 %v846, 4294901760
    %848 = vmatpush2.msra.mxu0 %v847
    %849 = vmatprep.subr.mxu0 0.0
    %v850 = vand.u32 %v88, 4294901760
    %v851 = vsub.f32 %v88, %v850
    %v852 = vand.u32 %v851, 4294901760
    %853 = vmatpush2.msra.mxu0 %v852
    %v854 = vand.u32 %v71, 4294901760
    %855 = vmatprep.mubr.f32.mxu0 %v854
    %v856 = vand.u32 %v70, 4294901760
    %857 = vmatmul.mubr.f32.gmra.mxu0 %v856
    %v858 = vpop.f32.mrf.mxu0
    %v859 = vadd.f32 %v691, %v858
    %v860 = vpop.f32.mrf.mxu0
    %861 = vdwg.mxu0
    %862 = vmatprep.subr.mxu0 0.0
    %v863 = vand.u32 %v87, 4294901760
    %864 = vmatpush1.msra.mxu0 %v863
    %865 = vmatprep.subr.mxu0 0.0
    %v866 = vand.u32 %v86, 4294901760
    %867 = vmatpush1.msra.mxu0 %v866
    %868 = vmatprep.subr.mxu0 0.0
    %v869 = vand.u32 %v85, 4294901760
    %870 = vmatpush1.msra.mxu0 %v869
    %871 = vmatprep.subr.mxu0 0.0
    %v872 = vand.u32 %v84, 4294901760
    %873 = vmatpush1.msra.mxu0 %v872
    %874 = vmatprep.subr.mxu0 0.0
    %v875 = vand.u32 %v83, 4294901760
    %876 = vmatpush1.msra.mxu0 %v875
    %877 = vmatprep.subr.mxu0 0.0
    %v878 = vand.u32 %v82, 4294901760
    %879 = vmatpush1.msra.mxu0 %v878
    %880 = vmatprep.subr.mxu0 0.0
    %v881 = vand.u32 %v81, 4294901760
    %882 = vmatpush1.msra.mxu0 %v881
    %883 = vmatprep.subr.mxu0 0.0
    %v884 = vand.u32 %v80, 4294901760
    %885 = vmatpush1.msra.mxu0 %v884
    %886 = vmatprep.subr.mxu0 0.0
    %v887 = vand.u32 %v79, 4294901760
    %888 = vmatpush1.msra.mxu0 %v887
    %889 = vmatprep.subr.mxu0 0.0
    %v890 = vand.u32 %v78, 4294901760
    %891 = vmatpush1.msra.mxu0 %v890
    %892 = vmatprep.subr.mxu0 0.0
    %v893 = vand.u32 %v77, 4294901760
    %894 = vmatpush1.msra.mxu0 %v893
    %895 = vmatprep.subr.mxu0 0.0
    %v896 = vand.u32 %v76, 4294901760
    %897 = vmatpush1.msra.mxu0 %v896
    %898 = vmatprep.subr.mxu0 0.0
    %v899 = vand.u32 %v75, 4294901760
    %900 = vmatpush1.msra.mxu0 %v899
    %901 = vmatprep.subr.mxu0 0.0
    %v902 = vand.u32 %v74, 4294901760
    %903 = vmatpush1.msra.mxu0 %v902
    %904 = vmatprep.subr.mxu0 0.0
    %v905 = vand.u32 %v73, 4294901760
    %906 = vmatpush1.msra.mxu0 %v905
    %907 = vmatprep.subr.mxu0 0.0
    %v908 = vand.u32 %v72, 4294901760
    %909 = vmatpush1.msra.mxu0 %v908
    %910 = vmatprep.subr.mxu0 0.0
    %v911 = vand.u32 %v103, 4294901760
    %912 = vmatpush2.msra.mxu0 %v911
    %913 = vmatprep.subr.mxu0 0.0
    %v914 = vand.u32 %v102, 4294901760
    %915 = vmatpush2.msra.mxu0 %v914
    %916 = vmatprep.subr.mxu0 0.0
    %v917 = vand.u32 %v101, 4294901760
    %918 = vmatpush2.msra.mxu0 %v917
    %919 = vmatprep.subr.mxu0 0.0
    %v920 = vand.u32 %v100, 4294901760
    %921 = vmatpush2.msra.mxu0 %v920
    %922 = vmatprep.subr.mxu0 0.0
    %v923 = vand.u32 %v99, 4294901760
    %924 = vmatpush2.msra.mxu0 %v923
    %925 = vmatprep.subr.mxu0 0.0
    %v926 = vand.u32 %v98, 4294901760
    %927 = vmatpush2.msra.mxu0 %v926
    %928 = vmatprep.subr.mxu0 0.0
    %v929 = vand.u32 %v97, 4294901760
    %930 = vmatpush2.msra.mxu0 %v929
    %931 = vmatprep.subr.mxu0 0.0
    %v932 = vand.u32 %v96, 4294901760
    %933 = vmatpush2.msra.mxu0 %v932
    %934 = vmatprep.subr.mxu0 0.0
    %v935 = vand.u32 %v95, 4294901760
    %936 = vmatpush2.msra.mxu0 %v935
    %937 = vmatprep.subr.mxu0 0.0
    %v938 = vand.u32 %v94, 4294901760
    %939 = vmatpush2.msra.mxu0 %v938
    %940 = vmatprep.subr.mxu0 0.0
    %v941 = vand.u32 %v93, 4294901760
    %942 = vmatpush2.msra.mxu0 %v941
    %943 = vmatprep.subr.mxu0 0.0
    %v944 = vand.u32 %v92, 4294901760
    %945 = vmatpush2.msra.mxu0 %v944
    %946 = vmatprep.subr.mxu0 0.0
    %v947 = vand.u32 %v91, 4294901760
    %948 = vmatpush2.msra.mxu0 %v947
    %949 = vmatprep.subr.mxu0 0.0
    %v950 = vand.u32 %v90, 4294901760
    %951 = vmatpush2.msra.mxu0 %v950
    %952 = vmatprep.subr.mxu0 0.0
    %v953 = vand.u32 %v89, 4294901760
    %954 = vmatpush2.msra.mxu0 %v953
    %955 = vmatprep.subr.mxu0 0.0
    %v956 = vand.u32 %v88, 4294901760
    %957 = vmatpush2.msra.mxu0 %v956
    %v958 = vand.u32 %v71, 4294901760
    %959 = vmatprep.mubr.f32.mxu0 %v958
    %v960 = vand.u32 %v70, 4294901760
    %961 = vmatmul.mubr.f32.gmra.mxu0 %v960
    %v962 = vpop.f32.mrf.mxu0
    %v963 = vadd.f32 %v859, %v962
    %v964 = vpop.f32.mrf.mxu0
    %965 = vdwg.mxu0
    %966 = vst [vmem:[#allocation5] sm:$0xff] %v963
    // Predicated region
    $region14: #{tpu_custom_call.1} parent=1 // pred_check
      _
    $region15: #{tpu_custom_call.1} parent=1 // pred_check_branch
      %968 = sbr.rel (0) target = $region17
    $region16: #{tpu_custom_call.1} parent=1 // pred_region
      %s970 = ssub.s32 128, 128
      %971 = vsyncadd [#allocation4], %s970
      %s973 = sshll.u32 [#allocation5], 4
      %s974 = int_to_ptr.vmem [resolvable:$true] %s973
      %976 = dma.vmem_to_hbm [thread:$0]  %s974, 128, %s2, [#allocation4]
    $region17: #{tpu_custom_call.1} parent=1 // pred_fallthru
      _
    // Predicated region
    $region18: #{tpu_custom_call.1} parent=1 // pred_check
      _
    $region19: #{tpu_custom_call.1} parent=1 // pred_check_branch
      %978 = sbr.rel (0) target = $region21
    $region20: #{tpu_custom_call.1} parent=1 // pred_region
      %979 = dma.done [#allocation4], 128
    $region21: #{tpu_custom_call.1} parent=1 // pred_fallthru
      _
    %980 = vsyncpa [#allocation3], 1
    %981 = vsyncpa [#allocation4], 1

</llo_original>
